<compile_context>
chip_gen: v7x
topology: tpu7x:2x2x1
jax: 0.10.0
libtpu: 0.0.40
codegen_flags: <defaults>
</compile_context>

<pallas_src>
import math

import jax
import jax.numpy as jnp
from jax.experimental import pallas as pl
from jax.experimental.pallas import tpu as pltpu


# ----------------------------- kernels ---------------------------------------------------
def _transition_kernel_mxu(xp_ref, w_ref, b_ref, thr_ref, out_ref):
    # xp_ref : (C_in, T) bf16 pooled 2x2 sums (channel-major, pooled pixels on lanes).
    # w_ref  : (C_out, C_in) bf16 with the 0.25 pool scale pre-folded.
    # b_ref  : (C_out, 1) f32.  thr_ref: (1, T) f32, a single W2 period, resident.
    y = jnp.dot(w_ref[...], xp_ref[...], preferred_element_type=jnp.float32) + b_ref[...]
    # snn.Leaky single step with zero initial membrane: mem = y, spk = H(mem - thr).
    out_ref[...] = (y > thr_ref[...]).astype(out_ref.dtype)
    # TODO(synk): atan surrogate gradient only affects backward; forward is exact heaviside.


def _transition_kernel_vpu(xp_ref, w_ref, b_ref, thr_ref, out_ref):
    # Same contract as the MXU kernel, but w_ref is f32 and the contraction is C_in
    # unrolled broadcast-FMAs on the VPU: for tiny C_in/C_out (the tested shape) the MXU
    # is <1% utilized and its pipeline/drain latency dominates.
    c_in = xp_ref.shape[0]
    xp = xp_ref[...].astype(jnp.float32)                     # (C_in, T)
    w = w_ref[...]                                            # (C_out, C_in) f32, 0.25 folded
    acc = w[:, 0:1] * xp[0:1, :]                              # (C_out, T) via broadcasts
    for c in range(1, c_in):                                  # static unroll; c_in small here
        acc = acc + w[:, c:c + 1] * xp[c:c + 1, :]
    y = acc + b_ref[...]
    out_ref[...] = (y > thr_ref[...]).astype(out_ref.dtype)


# ----------------------------- wrapper-side sizing helpers --------------------------------
def _use_mxu(c_in, c_out):
    # MXU path for realistic DenseNet channel counts; VPU broadcast-FMA path for tiny ones.
    return c_in > 32 or (min(c_in, c_out) >= 8 and c_in * c_out >= 256)


def _vmem_caps():
    try:
        cap = pltpu.get_tpu_info().vmem_capacity_bytes        # 128 MiB v5e/v6e, 64 MiB v7x
    except Exception:                                         # interpret mode / older jax
        cap = 64 << 20                                        # conservative (v7x-sized)
    tile_budget = int(cap * 0.70)                             # spendable on pipelined blocks
    vmem_limit = min(int(cap * 0.85), 120 << 20)              # raise default scoped limit
    return tile_budget, vmem_limit


def _choose_lane_tile(np_total, c_in, c_out, w2, budget_bytes):
    # T must be a multiple of 128 (lane-dense, unmasked vst) and of W2 (so one resident
    # thr period tiles exactly) -> multiple of lcm(128, W2).
    base = 128 * w2 // math.gcd(128, w2)
    # Per-step VMEM: double-buffered bf16 in/out blocks, resident thr, f32 compute temps.
    bytes_per_lane = 8 * c_in + 12 * c_out + 8
    t_fit = max(base, budget_bytes // bytes_per_lane // base * base)
    t_cover = -(-np_total // base) * base                     # smallest single-step tile
    t = min(t_fit, t_cover)
    # Prefer >=2 grid steps (v7x megacore sharding + DMA/compute pipelining) when the
    # problem is big enough; never shrink below one lane-dense period.
    if t >= t_cover and t_cover >= 2 * base:
        t = min(t, max(base, t_cover // 2 // base * base))
    return t


# ----------------------------- public entry point -----------------------------------------
def transition_block(x_nchw, w, b, beta, thr, *, channel_major_output=True):
    """TransitionBlock forward: spk = H(conv1x1(avgpool2x2(x)) - thr).

    Returns bf16 spikes in the kernel-native channel-major layout (C_out, N, H/2, W/2)
    by default (free to chain into the next block); channel_major_output=False returns
    the PyTorch-parity NCHW layout (one extra pass over the small output).

    `beta` is accepted for interface parity but is mathematically dead in this
    single-step forward (mem0 = init_leaky() = 0 -> reset = 0 -> mem = conv(pool(x))).
    """
    del beta
    N, C_in, H, W = x_nchw.shape
    C_out = w.shape[0]
    H2, W2 = H // 2, W // 2
    NP = N * H2 * W2

    use_mxu = _use_mxu(C_in, C_out)
    tile_budget, vmem_limit = _vmem_caps()
    T = _choose_lane_tile(NP, C_in, C_out, W2, tile_budget)
    NP_pad = -(-NP // T) * T
    grid = (NP_pad // T,)

    # ---- pooling + relayout in one small XLA pass (the only HBM intermediate, x/4 in bf16)
    xr = x_nchw.reshape(N, C_in, H2, 2, W2, 2)                       # free reshape
    pooled = (xr[:, :, :, 0, :, 0] + xr[:, :, :, 0, :, 1]
              + xr[:, :, :, 1, :, 0] + xr[:, :, :, 1, :, 1])         # f32 2x2 window SUMS
    # channel-major with batch folded into the lane axis: (C_in, N*H2*W2)
    xp = jnp.transpose(pooled.astype(jnp.bfloat16), (1, 0, 2, 3)).reshape(C_in, NP)
    # TODO(synk): a fully in-kernel variant would read NCHW slabs and extract the 2x2
    # phases with strided loads; the lane-stride-2 selection has no cheap portable Mosaic
    # lowering, so the (4x smaller) pooled relayout stays in XLA.
    # TODO(synk): when the upstream DenseBlock emits binary spikes, carry x/pooled sums as
    # int8 for the MXU on v5e/v6e (fp8 or bf16 on v7x) to halve input bytes again.
    if NP_pad != NP:
        xp = jnp.pad(xp, ((0, 0), (0, NP_pad - NP)))

    w_eff = (0.25 * w).astype(jnp.bfloat16 if use_mxu else jnp.float32)   # fold pool scale
    b2 = b.reshape(C_out, 1).astype(jnp.float32)
    # thr has shape (W2,) and broadcasts along W; one (1, T) period stays resident.
    thr_tile = jnp.tile(thr, T // W2).reshape(1, T).astype(jnp.float32)

    kernel = _transition_kernel_mxu if use_mxu else _transition_kernel_vpu

    cost = pl.CostEstimate(
        flops=2 * C_out * C_in * NP_pad,
        transcendentals=0,
        bytes_accessed=(2 * C_in * NP_pad + 2 * C_out * NP_pad
                        + int(w_eff.size) * w_eff.dtype.itemsize + 4 * C_out + 4 * T),
    )

    out_flat = pl.pallas_call(
        kernel,
        out_shape=jax.ShapeDtypeStruct((C_out, NP_pad), jnp.bfloat16),   # {0,1} exact in bf16
        grid_spec=pltpu.PrefetchScalarGridSpec(
            num_scalar_prefetch=0,
            grid=grid,
            in_specs=[
                pl.BlockSpec((C_in, T), lambda t: (0, t)),
                pl.BlockSpec((C_out, C_in), lambda t: (0, 0)),
                pl.BlockSpec((C_out, 1), lambda t: (0, 0)),
                pl.BlockSpec((1, T), lambda t: (0, 0)),    # single resident thr period
            ],
            out_specs=pl.BlockSpec((C_out, T), lambda t: (0, t)),
        ),
        compiler_params=pltpu.CompilerParams(
            dimension_semantics=("parallel",),   # independent lane tiles (shards v7x's 2 TCs)
            vmem_limit_bytes=vmem_limit,
        ),
        cost_estimate=cost,
    )(xp, w_eff, b2, thr_tile)

    if NP_pad != NP:
        out_flat = out_flat[:, :NP]
    out_cm = out_flat.reshape(C_out, N, H2, W2)
    if channel_major_output:
        return out_cm
    return jnp.transpose(out_cm, (1, 0, 2, 3))               # PyTorch-parity NCHW


# ----------------------------- pure-JAX reference -----------------------------------------
def transition_block_reference(x, w, b, thr, *, use_mxu):
    # Mirrors the PyTorch forward with the same rounding steps as the kernel path
    # (pooled sums rounded to bf16; weight rounded to bf16 on the MXU path) so the
    # heaviside comparison is stable.
    p = (x[:, :, 0::2, 0::2] + x[:, :, 0::2, 1::2]
         + x[:, :, 1::2, 0::2] + x[:, :, 1::2, 1::2])          # f32 sums (pool * 4)
    p = p.astype(jnp.bfloat16).astype(jnp.float32)
    w_eff = 0.25 * w
    if use_mxu:
        w_eff = w_eff.astype(jnp.bfloat16).astype(jnp.float32)
    y = jnp.einsum("oc,nchw->nohw", w_eff, p,
                   preferred_element_type=jnp.float32) + b[None, :, None, None]
    return (y > thr[None, None, None, :]).astype(jnp.float32)


if __name__ == "__main__":
    key = jax.random.PRNGKey(0)
    N, C_in, C_out, H, W = 2, 8, 4, 16, 16
    beta_shape = H  # TransitionBlock params have length beta_shape // 2 == W // 2

    k = jax.random.split(key, 5)
    x = jax.random.normal(k[0], (N, C_in, H, W), dtype=jnp.float32)

    # Conv2d(in, out, kernel_size=1): weight (C_out, C_in, 1, 1) -> (C_out, C_in), bias (C_out,)
    lim = 1.0 / (C_in ** 0.5)
    w = jax.random.uniform(k[1], (C_out, C_in), minval=-lim, maxval=lim, dtype=jnp.float32)
    b = jax.random.uniform(k[2], (C_out,), minval=-lim, maxval=lim, dtype=jnp.float32)
    # beta1 = torch.rand(beta_shape // 2), thr1 = torch.rand(beta_shape // 2)
    beta = jax.random.uniform(k[3], (beta_shape // 2,), dtype=jnp.float32)
    thr = jax.random.uniform(k[4], (beta_shape // 2,), dtype=jnp.float32)

    # Kernel-native channel-major output (no NCHW transpose pass).
    out_cm = jax.block_until_ready(transition_block(x, w, b, beta, thr))
    assert out_cm.shape == (C_out, N, H // 2, W // 2)

    ref_nchw = transition_block_reference(x, w, b, thr, use_mxu=_use_mxu(C_in, C_out))
    ref_cm = jnp.transpose(ref_nchw, (1, 0, 2, 3))
    # Spikes are {0,1}; allow a couple of boundary flips from accumulation-order
    # differences between the kernel and the XLA reference (a real bug flips ~half).
    mismatch = float(jnp.mean(jnp.abs(out_cm.astype(jnp.float32) - ref_cm)))
    assert mismatch <= 1e-2, f"spike mismatch fraction {mismatch}"

    # PyTorch-parity NCHW layout is one transpose away and must agree.
    out_nchw = transition_block(x, w, b, beta, thr, channel_major_output=False)
    assert out_nchw.shape == (N, C_out, H // 2, W // 2)
    assert bool(jnp.all(out_nchw == jnp.transpose(out_cm, (1, 0, 2, 3))))

    print("KERNEL_OK")
</pallas_src>

<mosaic_0001>
module attributes {stable_mosaic.version = 11 : i64} {
  func.func @_transition_kernel_vpu(%arg0: i32, %arg1: memref<8x128xbf16, #tpu.memory_space<vmem>>, %arg2: memref<4x8xf32, #tpu.memory_space<vmem>>, %arg3: memref<4x1xf32, #tpu.memory_space<vmem>>, %arg4: memref<1x128xf32, #tpu.memory_space<vmem>>, %arg5: memref<4x128xbf16, #tpu.memory_space<vmem>>) attributes {dimension_semantics = [#tpu.dimension_semantics<parallel>], iteration_bounds = array<i64: 1>, scalar_prefetch = 0 : i64, scratch_operands = 0 : i64, tpu.core_type = #tpu.core_type<tc>, window_params = [{transform_indices = @transform_0, window_bounds = array<i64: 8, 128>}, {pipeline_mode = #tpu.pipeline_mode<synchronous>, transform_indices = @transform_1, window_bounds = array<i64: 4, 8>}, {pipeline_mode = #tpu.pipeline_mode<synchronous>, transform_indices = @transform_2, window_bounds = array<i64: 4, 1>}, {pipeline_mode = #tpu.pipeline_mode<synchronous>, transform_indices = @transform_3, window_bounds = array<i64: 1, 128>}, {transform_indices = @transform_4, window_bounds = array<i64: 4, 128>}]} {
    %c0 = arith.constant 0 : index
    %c0_0 = arith.constant 0 : index
    %0 = vector.load %arg1[%c0, %c0_0] : memref<8x128xbf16, #tpu.memory_space<vmem>>, vector<8x128xbf16>
    %1 = arith.extf %0 : vector<8x128xbf16> to vector<8x128xf32>
    %c0_1 = arith.constant 0 : index
    %c0_2 = arith.constant 0 : index
    %2 = vector.load %arg2[%c0_1, %c0_2] : memref<4x8xf32, #tpu.memory_space<vmem>>, vector<4x8xf32>
    %3 = vector.extract_strided_slice %2 {offsets = [0, 0], sizes = [4, 1], strides = [1, 1]} : vector<4x8xf32> to vector<4x1xf32>
    %4 = vector.extract_strided_slice %1 {offsets = [0, 0], sizes = [1, 128], strides = [1, 1]} : vector<8x128xf32> to vector<1x128xf32>
    %5 = vector.broadcast %3 : vector<4x1xf32> to vector<4x128xf32>
    %6 = vector.broadcast %4 : vector<1x128xf32> to vector<4x128xf32>
    %7 = arith.mulf %5, %6 : vector<4x128xf32>
    %8 = vector.extract_strided_slice %2 {offsets = [0, 1], sizes = [4, 1], strides = [1, 1]} : vector<4x8xf32> to vector<4x1xf32>
    %9 = vector.extract_strided_slice %1 {offsets = [1, 0], sizes = [1, 128], strides = [1, 1]} : vector<8x128xf32> to vector<1x128xf32>
    %10 = vector.broadcast %8 : vector<4x1xf32> to vector<4x128xf32>
    %11 = vector.broadcast %9 : vector<1x128xf32> to vector<4x128xf32>
    %12 = arith.mulf %10, %11 : vector<4x128xf32>
    %13 = arith.addf %7, %12 : vector<4x128xf32>
    %14 = vector.extract_strided_slice %2 {offsets = [0, 2], sizes = [4, 1], strides = [1, 1]} : vector<4x8xf32> to vector<4x1xf32>
    %15 = vector.extract_strided_slice %1 {offsets = [2, 0], sizes = [1, 128], strides = [1, 1]} : vector<8x128xf32> to vector<1x128xf32>
    %16 = vector.broadcast %14 : vector<4x1xf32> to vector<4x128xf32>
    %17 = vector.broadcast %15 : vector<1x128xf32> to vector<4x128xf32>
    %18 = arith.mulf %16, %17 : vector<4x128xf32>
    %19 = arith.addf %13, %18 : vector<4x128xf32>
    %20 = vector.extract_strided_slice %2 {offsets = [0, 3], sizes = [4, 1], strides = [1, 1]} : vector<4x8xf32> to vector<4x1xf32>
    %21 = vector.extract_strided_slice %1 {offsets = [3, 0], sizes = [1, 128], strides = [1, 1]} : vector<8x128xf32> to vector<1x128xf32>
    %22 = vector.broadcast %20 : vector<4x1xf32> to vector<4x128xf32>
    %23 = vector.broadcast %21 : vector<1x128xf32> to vector<4x128xf32>
    %24 = arith.mulf %22, %23 : vector<4x128xf32>
    %25 = arith.addf %19, %24 : vector<4x128xf32>
    %26 = vector.extract_strided_slice %2 {offsets = [0, 4], sizes = [4, 1], strides = [1, 1]} : vector<4x8xf32> to vector<4x1xf32>
    %27 = vector.extract_strided_slice %1 {offsets = [4, 0], sizes = [1, 128], strides = [1, 1]} : vector<8x128xf32> to vector<1x128xf32>
    %28 = vector.broadcast %26 : vector<4x1xf32> to vector<4x128xf32>
    %29 = vector.broadcast %27 : vector<1x128xf32> to vector<4x128xf32>
    %30 = arith.mulf %28, %29 : vector<4x128xf32>
    %31 = arith.addf %25, %30 : vector<4x128xf32>
    %32 = vector.extract_strided_slice %2 {offsets = [0, 5], sizes = [4, 1], strides = [1, 1]} : vector<4x8xf32> to vector<4x1xf32>
    %33 = vector.extract_strided_slice %1 {offsets = [5, 0], sizes = [1, 128], strides = [1, 1]} : vector<8x128xf32> to vector<1x128xf32>
    %34 = vector.broadcast %32 : vector<4x1xf32> to vector<4x128xf32>
    %35 = vector.broadcast %33 : vector<1x128xf32> to vector<4x128xf32>
    %36 = arith.mulf %34, %35 : vector<4x128xf32>
    %37 = arith.addf %31, %36 : vector<4x128xf32>
    %38 = vector.extract_strided_slice %2 {offsets = [0, 6], sizes = [4, 1], strides = [1, 1]} : vector<4x8xf32> to vector<4x1xf32>
    %39 = vector.extract_strided_slice %1 {offsets = [6, 0], sizes = [1, 128], strides = [1, 1]} : vector<8x128xf32> to vector<1x128xf32>
    %40 = vector.broadcast %38 : vector<4x1xf32> to vector<4x128xf32>
    %41 = vector.broadcast %39 : vector<1x128xf32> to vector<4x128xf32>
    %42 = arith.mulf %40, %41 : vector<4x128xf32>
    %43 = arith.addf %37, %42 : vector<4x128xf32>
    %44 = vector.extract_strided_slice %2 {offsets = [0, 7], sizes = [4, 1], strides = [1, 1]} : vector<4x8xf32> to vector<4x1xf32>
    %45 = vector.extract_strided_slice %1 {offsets = [7, 0], sizes = [1, 128], strides = [1, 1]} : vector<8x128xf32> to vector<1x128xf32>
    %46 = vector.broadcast %44 : vector<4x1xf32> to vector<4x128xf32>
    %47 = vector.broadcast %45 : vector<1x128xf32> to vector<4x128xf32>
    %48 = arith.mulf %46, %47 : vector<4x128xf32>
    %49 = arith.addf %43, %48 : vector<4x128xf32>
    %c0_3 = arith.constant 0 : index
    %c0_4 = arith.constant 0 : index
    %50 = vector.load %arg3[%c0_3, %c0_4] : memref<4x1xf32, #tpu.memory_space<vmem>>, vector<4x1xf32>
    %51 = vector.broadcast %50 : vector<4x1xf32> to vector<4x128xf32>
    %52 = arith.addf %49, %51 : vector<4x128xf32>
    %c0_5 = arith.constant 0 : index
    %c0_6 = arith.constant 0 : index
    %53 = vector.load %arg4[%c0_5, %c0_6] : memref<1x128xf32, #tpu.memory_space<vmem>>, vector<1x128xf32>
    %54 = vector.broadcast %53 : vector<1x128xf32> to vector<4x128xf32>
    %55 = arith.cmpf ogt, %52, %54 : vector<4x128xf32>
    %56 = arith.extui %55 : vector<4x128xi1> to vector<4x128xi32>
    %57 = arith.sitofp %56 : vector<4x128xi32> to vector<4x128xf32>
    %58 = arith.truncf %57 : vector<4x128xf32> to vector<4x128xbf16>
    %c0_7 = arith.constant 0 : index
    %c0_8 = arith.constant 0 : index
    %59 = vector.load %arg5[%c0_7, %c0_8] : memref<4x128xbf16, #tpu.memory_space<vmem>>, vector<4x128xbf16>
    tpu.vector_store %arg5[%c0_7, %c0_8], %58 {strides = array<i32>} : memref<4x128xbf16, #tpu.memory_space<vmem>>, vector<4x128xbf16>,
    return
  }
  func.func @transform_0(%arg0: i32) -> (i32, i32) {
    %c0_i32 = arith.constant 0 : i32
    %c0_i32_0 = arith.constant 0 : i32
    return %c0_i32, %arg0 : i32, i32
  }
  func.func @transform_1(%arg0: i32) -> (i32, i32) {
    %c0_i32 = arith.constant 0 : i32
    %c0_i32_0 = arith.constant 0 : i32
    %c0_i32_1 = arith.constant 0 : i32
    return %c0_i32, %c0_i32_0 : i32, i32
  }
  func.func @transform_2(%arg0: i32) -> (i32, i32) {
    %c0_i32 = arith.constant 0 : i32
    %c0_i32_0 = arith.constant 0 : i32
    %c0_i32_1 = arith.constant 0 : i32
    return %c0_i32, %c0_i32_0 : i32, i32
  }
  func.func @transform_3(%arg0: i32) -> (i32, i32) {
    %c0_i32 = arith.constant 0 : i32
    %c0_i32_0 = arith.constant 0 : i32
    %c0_i32_1 = arith.constant 0 : i32
    return %c0_i32, %c0_i32_0 : i32, i32
  }
  func.func @transform_4(%arg0: i32) -> (i32, i32) {
    %c0_i32 = arith.constant 0 : i32
    %c0_i32_0 = arith.constant 0 : i32
    return %c0_i32, %arg0 : i32, i32
  }
}

</mosaic_0001>

<llo_original>
// kernel: tpu_custom_call.1
$region0: #{tpu_custom_call.1}
  #allocation0 [shape = 'u32[]', space=smem, size = 0x4, offset = 0x4, fixed_abs, tag = 'smem constant byte address 0x4 - core index']
  #allocation1 [shape = 'u32[144,128]{1,0:T(1,128)}', space=vmem, size = 0x12000, scoped, tag = 'internal scratch']
  %s0 = inlined_call_operand.vmem [shape: bf16[8,128], index: 0, kind: input, shape index: {}]
  %s1 = inlined_call_operand.vmem [shape: f32[4,8], index: 1, kind: input, shape index: {}]
  %s2 = inlined_call_operand.vmem [shape: f32[4,1], index: 2, kind: input, shape index: {}]
  %s3 = inlined_call_operand.vmem [shape: f32[1,128], index: 3, kind: input, shape index: {}]
  %s4 = inlined_call_operand.hbm [shape: bf16[4,128], index: 4, kind: output, shape index: {}]
  %s5 = sld [smem:[#allocation0]]
  $region26: #{tpu_custom_call.1} parent=0
    _
  %s7 = ssub.s32 1, %s5
  %s8 = scalar_select 0, %s7, %s5
  $region1: #{tpu_custom_call.1} parent=0
    #allocation2 [shape = 'u8[1024]{0}', space=vmem, size = 0x400, scoped, tag = 'output window, operand 0, single buffered']
    #allocation3 [shape = 's32[1]{0}', space=sflag, size = 0x4, scoped, tag = 'scoped memory for tpu_custom_call.1']
    %9 = vsyncpa [#allocation3], 0
    // Predicated region
    $region2: #{tpu_custom_call.1} parent=1 // pred_check
      _
    $region3: #{tpu_custom_call.1} parent=1 // pred_check_branch
      %11 = sbr.rel (0) target = $region5
    $region4: #{tpu_custom_call.1} parent=1 // pred_region
      _
    $region5: #{tpu_custom_call.1} parent=1 // pred_fallthru
      _
    // Predicated region
    $region6: #{tpu_custom_call.1} parent=1 // pred_check
      _
    $region7: #{tpu_custom_call.1} parent=1 // pred_check_branch
      %13 = sbr.rel (0) target = $region9
    $region8: #{tpu_custom_call.1} parent=1 // pred_region
      _
    $region9: #{tpu_custom_call.1} parent=1 // pred_fallthru
      _
    // Predicated region
    $region10: #{tpu_custom_call.1} parent=1 // pred_check
      _
    $region11: #{tpu_custom_call.1} parent=1 // pred_check_branch
      %15 = sbr.rel (0) target = $region13
    $region12: #{tpu_custom_call.1} parent=1 // pred_region
      _
    $region13: #{tpu_custom_call.1} parent=1 // pred_fallthru
      _
    // Predicated region
    $region14: #{tpu_custom_call.1} parent=1 // pred_check
      _
    $region15: #{tpu_custom_call.1} parent=1 // pred_check_branch
      %17 = sbr.rel (0) target = $region17
    $region16: #{tpu_custom_call.1} parent=1 // pred_region
      _
    $region17: #{tpu_custom_call.1} parent=1 // pred_fallthru
      _
    %v18 = vld [vmem:[%s0] sm:$0xf]
    %v19 = vunpack.c.l.bf16 %v18
    %v20 = vld [vmem:[%s1] sm:$0xf]
    %22 = vset.pattern.permute.xlu0 0
    %23 = vperm.xlu0 %22, %v20
    %v24 = vpop.permute.xlu0 %23
    %v26 = vlaneseq
    %v27 = vshrl.u32 %v26, 7
    %v28 = vsub.s32 0, %v27
    %v29 = vrot.slane %v19, %v28
    %v30 = vmul.f32 %v24, %v29
    %31 = vset.pattern.permute.xlu0 1
    %32 = vperm.xlu0 %31, %v20
    %v33 = vpop.permute.xlu0 %32
    %v35 = vlaneseq
    %v36 = vshrl.u32 %v35, 7
    %v37 = vsub.s32 1, %v36
    %v38 = vrot.slane %v19, %v37
    %v39 = vmul.f32 %v33, %v38
    %v40 = vadd.f32 %v30, %v39
    %41 = vset.pattern.permute.xlu0 2
    %42 = vperm.xlu0 %41, %v20
    %v43 = vpop.permute.xlu0 %42
    %v45 = vlaneseq
    %v46 = vshrl.u32 %v45, 7
    %v47 = vsub.s32 2, %v46
    %v48 = vrot.slane %v19, %v47
    %v49 = vmul.f32 %v43, %v48
    %v50 = vadd.f32 %v40, %v49
    %51 = vset.pattern.permute.xlu0 3
    %52 = vperm.xlu0 %51, %v20
    %v53 = vpop.permute.xlu0 %52
    %v55 = vlaneseq
    %v56 = vshrl.u32 %v55, 7
    %v57 = vsub.s32 3, %v56
    %v58 = vrot.slane %v19, %v57
    %v59 = vmul.f32 %v53, %v58
    %v60 = vadd.f32 %v50, %v59
    %61 = vset.pattern.permute.xlu0 4
    %62 = vperm.xlu0 %61, %v20
    %v63 = vpop.permute.xlu0 %62
    %v65 = vlaneseq
    %v66 = vshrl.u32 %v65, 7
    %v67 = vsub.s32 4, %v66
    %v68 = vrot.slane %v19, %v67
    %v69 = vmul.f32 %v63, %v68
    %v70 = vadd.f32 %v60, %v69
    %71 = vset.pattern.permute.xlu0 5
    %72 = vperm.xlu0 %71, %v20
    %v73 = vpop.permute.xlu0 %72
    %v75 = vlaneseq
    %v76 = vshrl.u32 %v75, 7
    %v77 = vsub.s32 5, %v76
    %v78 = vrot.slane %v19, %v77
    %v79 = vmul.f32 %v73, %v78
    %v80 = vadd.f32 %v70, %v79
    %81 = vset.pattern.permute.xlu0 6
    %82 = vperm.xlu0 %81, %v20
    %v83 = vpop.permute.xlu0 %82
    %v85 = vlaneseq
    %v86 = vshrl.u32 %v85, 7
    %v87 = vsub.s32 6, %v86
    %v88 = vrot.slane %v19, %v87
    %v89 = vmul.f32 %v83, %v88
    %v90 = vadd.f32 %v80, %v89
    %91 = vset.pattern.permute.xlu0 7
    %92 = vperm.xlu0 %91, %v20
    %v93 = vpop.permute.xlu0 %92
    %v95 = vlaneseq
    %v96 = vshrl.u32 %v95, 7
    %v97 = vsub.s32 7, %v96
    %v98 = vrot.slane %v19, %v97
    %v99 = vmul.f32 %v93, %v98
    %v100 = vadd.f32 %v90, %v99
    %v101 = vld [vmem:[%s2] sm:$0xf]
    %103 = vset.pattern.permute.xlu0 0
    %104 = vperm.xlu0 %103, %v101
    %v105 = vpop.permute.xlu0 %104
    %v107 = vadd.f32 %v100, %v105
    %v108 = vld [vmem:[%s3] sm:$0x1]
    %v110 = vlaneseq
    %v111 = vshrl.u32 %v110, 7
    %v112 = vsub.s32 0, %v111
    %v113 = vrot.slane %v108, %v112
    %vm115 = vcmp.gt.f32.partialorder %v107, %v113
    %v116 = vsel %vm115, 1, 0
    %v117 = vcvt.s32.f32 %v116
    %v118 = vpack.c.bf16 %v117, %v117
    %119 = vst [vmem:[#allocation2] sm:$0x3] %v118
    // Predicated region
    $region18: #{tpu_custom_call.1} parent=1 // pred_check
      _
    $region19: #{tpu_custom_call.1} parent=1 // pred_check_branch
      %121 = sbr.rel (0) target = $region21
    $region20: #{tpu_custom_call.1} parent=1 // pred_region
      %s123 = ssub.s32 32, 32
      %124 = vsyncadd [#allocation3], %s123
      %s126 = sshll.u32 [#allocation2], 4
      %s127 = int_to_ptr.vmem [resolvable:$true] %s126
      %129 = dma.vmem_to_hbm [thread:$0]  %s127, 32, %s4, [#allocation3]
    $region21: #{tpu_custom_call.1} parent=1 // pred_fallthru
      _
    // Predicated region
    $region22: #{tpu_custom_call.1} parent=1 // pred_check
      _
    $region23: #{tpu_custom_call.1} parent=1 // pred_check_branch
      %131 = sbr.rel (0) target = $region25
    $region24: #{tpu_custom_call.1} parent=1 // pred_region
      %132 = dma.done [#allocation3], 32
    $region25: #{tpu_custom_call.1} parent=1 // pred_fallthru
      _
    %133 = vsyncpa [#allocation3], 1

</llo_original>
